<compile_context>
chip_gen: v6e
topology: v6e:2x2x1
jax: 0.10.0
libtpu: 0.0.40
codegen_flags: <defaults>
</compile_context>

<pallas_src>
import functools

import jax
import jax.numpy as jnp
from jax.experimental import pallas as pl
from jax.experimental.pallas import tpu as pltpu


# ---------------------------------------------------------------------------
# Kernels
# ---------------------------------------------------------------------------

def _fraclu_rowwise_kernel(slope_ref, x_ref, o_ref):
    """FracLU on a (brows, bhw) tile with per-row (= per (batch, channel)) slopes.

    slope_ref is (brows, 2): column 0 = positive slope, column 1 = negative.
    """
    x = x_ref[...]
    pos = slope_ref[:, 0:1]                      # (brows, 1)
    neg = slope_ref[:, 1:2]                      # (brows, 1)
    o_ref[...] = (x * jnp.where(x >= 0, pos, neg)).astype(o_ref.dtype)


def _fraclu_colwise_kernel(slope_ref, x_ref, o_ref):
    """FracLU on an (N, bcols) tile with per-column (= per (channel, pixel)) slopes.

    slope_ref is (2, bcols): row 0 = positive slope, row 1 = negative.
    """
    x = x_ref[...]
    pos = slope_ref[0:1, :]                      # (1, bcols)
    neg = slope_ref[1:2, :]                      # (1, bcols)
    o_ref[...] = (x * jnp.where(x >= 0, pos, neg)).astype(o_ref.dtype)


# ---------------------------------------------------------------------------
# Wrapper
# ---------------------------------------------------------------------------

def _sublane_count(dtype) -> int:
    # Sub-32-bit dtypes pack along sublanes: f32 -> 8, bf16/f16 -> 16, int8 -> 32.
    return {4: 8, 2: 16, 1: 32}.get(jnp.dtype(dtype).itemsize, 8)


def _round_down(a: int, b: int) -> int:
    return (a // b) * b


_VMEM_LIMIT = 48 * 1024 * 1024           # leaves headroom under v7x's 64 MiB VMEM
_MAX_BLOCK_BYTES = 4 * 1024 * 1024       # ~4 MiB of x per block


@functools.partial(jax.jit, static_argnames=("block_bytes",))
def fraclu_forward(x, pos_alpha, pos_beta, neg_alpha, neg_beta, *, block_bytes=None):
    """FracLU forward for NCHW input x with channel-wise (C,) parameters."""
    N, C, H, W = x.shape
    HW = H * W
    R = N * C
    itemsize = jnp.dtype(x.dtype).itemsize
    sub = _sublane_count(x.dtype)
    total_bytes = N * C * HW * itemsize

    # ---- per-tile byte budget --------------------------------------------
    # ~4 MiB of x per block sits near the HBM roofline on v5e/v6e/v7x while the
    # double-buffered in+out (~16 MiB) stays under the explicit 48 MiB VMEM
    # limit.  Mid-sized inputs shrink the budget so the grid has >= ~4 blocks
    # (real pipelining + 2-TC sharding on v7x instead of a (1, 1) grid).
    if block_bytes is not None:
        target = max(16 * 1024, int(block_bytes))
    elif total_bytes > 2 * 1024 * 1024:
        target = min(_MAX_BLOCK_BYTES, total_bytes // 4)
    else:
        target = _MAX_BLOCK_BYTES

    # Native 16-bit math for bf16/f16 inputs; exact f32 otherwise.
    if jnp.dtype(x.dtype) in (jnp.dtype(jnp.bfloat16), jnp.dtype(jnp.float16)):
        compute_dtype = x.dtype
    else:
        compute_dtype = jnp.float32
    slope_itemsize = jnp.dtype(compute_dtype).itemsize

    # ---- slopes precomputed in the wrapper (O(C) work, no divides in-kernel)
    pos_slope = pos_alpha.astype(jnp.float32) / jnp.maximum(
        pos_beta.astype(jnp.float32), 1.0)
    neg_slope = neg_alpha.astype(jnp.float32) / jnp.maximum(
        neg_beta.astype(jnp.float32), 1.0)
    pos_slope = pos_slope.astype(compute_dtype)
    neg_slope = neg_slope.astype(compute_dtype)

    cost = pl.CostEstimate(
        flops=2 * N * C * HW,
        transcendentals=0,
        bytes_accessed=2 * total_bytes + 2 * C * HW * slope_itemsize,
    )

    # ---- lane-dense column-wise path for small spatial extents ------------
    # When HW < 128 the (N*C, HW) layout forces masked vst.msk stores and short
    # DMA bursts.  Reshaping to (N, C*HW) is free (contiguous) and makes the
    # lane axis dense; the per-column slope vector is tiny.
    use_colwise = (HW < 128) and (N * 128 * itemsize <= target)

    if use_colwise:
        CT = C * HW
        x2 = x.reshape(N, CT)
        slopes = jnp.stack(
            [jnp.repeat(pos_slope, HW), jnp.repeat(neg_slope, HW)], axis=0)  # (2, CT)

        lane_cap = max(128, _round_down(target // max(1, N * itemsize), 128))
        bcols = CT if CT <= lane_cap else lane_cap        # ragged tail handled by cdiv
        grid = (pl.cdiv(CT, bcols),)

        out2 = pl.pallas_call(
            _fraclu_colwise_kernel,
            out_shape=jax.ShapeDtypeStruct((N, CT), x.dtype),
            grid_spec=pltpu.PrefetchScalarGridSpec(
                num_scalar_prefetch=0,
                grid=grid,
                in_specs=[pl.BlockSpec((2, bcols), lambda j: (0, j)),
                          pl.BlockSpec((N, bcols), lambda j: (0, j))],
                out_specs=pl.BlockSpec((N, bcols), lambda j: (0, j)),
            ),
            compiler_params=pltpu.CompilerParams(
                dimension_semantics=("parallel",),
                vmem_limit_bytes=_VMEM_LIMIT,
            ),
            cost_estimate=cost,
        )(slopes, x2)
        return out2.reshape(N, C, H, W)

    # ---- row-wise (N*C, HW) path -------------------------------------------
    slopes_c = jnp.stack([pos_slope, neg_slope], axis=-1)                 # (C, 2)
    slopes = jnp.broadcast_to(slopes_c[None], (N, C, 2)).reshape(R, 2)    # (R, 2)
    x2 = x.reshape(R, HW)

    # Lane (HW) block: cap it assuming the row block will be at least one
    # sublane group, so sublane rounding below can never blow the budget.
    # Ragged HW is split too (128-multiple blocks; Pallas pads the tail).
    lane_cap = max(128, _round_down(target // (sub * itemsize), 128))
    bhw = HW if HW <= lane_cap else lane_cap

    rows = max(sub, _round_down(target // max(1, bhw * itemsize), sub))
    brows = R if R <= rows else rows

    grid = (pl.cdiv(R, brows), pl.cdiv(HW, bhw))
    # Keep (rows, hw) grid order with HW innermost: the slope block index only
    # depends on i, so it is DMA'd once per row-block and reused across HW.
    slope_spec = pl.BlockSpec((brows, 2), lambda i, j: (i, 0))
    x_spec = pl.BlockSpec((brows, bhw), lambda i, j: (i, j))

    out2 = pl.pallas_call(
        _fraclu_rowwise_kernel,
        out_shape=jax.ShapeDtypeStruct((R, HW), x.dtype),
        grid_spec=pltpu.PrefetchScalarGridSpec(
            num_scalar_prefetch=0,
            grid=grid,
            in_specs=[slope_spec, x_spec],
            out_specs=x_spec,
        ),
        compiler_params=pltpu.CompilerParams(
            dimension_semantics=("parallel", "parallel"),
            vmem_limit_bytes=_VMEM_LIMIT,
        ),
        cost_estimate=cost,
    )(slopes, x2)
    return out2.reshape(N, C, H, W)


def fraclu_reference(x, pos_alpha, pos_beta, neg_alpha, neg_beta):
    """Plain-JAX reference matching the PyTorch forward exactly (f32 slopes)."""
    pos_slope = pos_alpha.astype(jnp.float32) / jnp.maximum(
        pos_beta.astype(jnp.float32), 1.0)
    neg_slope = neg_alpha.astype(jnp.float32) / jnp.maximum(
        neg_beta.astype(jnp.float32), 1.0)
    # channel_wise and x.dim() > 2: view as (1, C, 1, 1)
    pos_slope = pos_slope.reshape(1, -1, 1, 1)
    neg_slope = neg_slope.reshape(1, -1, 1, 1)
    xf = x.astype(jnp.float32)
    pos_part = jnp.where(xf >= 0, pos_slope * xf, jnp.zeros_like(xf))
    neg_part = jnp.where(xf < 0, neg_slope * xf, jnp.zeros_like(xf))
    return pos_part + neg_part


def _check(x, pa, pb, na, nb, *, atol, rtol, block_bytes=None):
    out = fraclu_forward(x, pa, pb, na, nb, block_bytes=block_bytes)
    out = jax.block_until_ready(out)
    assert out.shape == x.shape and out.dtype == x.dtype
    ref = fraclu_reference(x, pa, pb, na, nb)
    assert jnp.allclose(out.astype(jnp.float32), ref, atol=atol, rtol=rtol), \
        "mismatch vs reference"


if __name__ == "__main__":
    key = jax.random.PRNGKey(0)
    k1, k2, k3 = jax.random.split(key, 3)

    # --- Test 1: main example (NCHW, matching PyTorch), FracLU defaults -----
    # init_pos_slope=1.0 -> Fraction(1, 1); init_neg_slope=0.01 -> Fraction(1, 100);
    # slope_init_strategy='fixed' leaves parameters unchanged.
    N, C, H, W = 2, 4, 16, 16
    x = jax.random.normal(k1, (N, C, H, W), dtype=jnp.float32)
    pos_alpha = jnp.full((C,), 1.0, dtype=jnp.float32)
    pos_beta = jnp.full((C,), 1.0, dtype=jnp.float32)
    neg_alpha = jnp.full((C,), 1.0, dtype=jnp.float32)
    neg_beta = jnp.full((C,), 100.0, dtype=jnp.float32)
    _check(x, pos_alpha, pos_beta, neg_alpha, neg_beta, atol=1e-6, rtol=1e-6)

    # --- Test 2: same data, tiny block budget -> multi-block (1, 2) grid ----
    _check(x, pos_alpha, pos_beta, neg_alpha, neg_beta,
           atol=1e-6, rtol=1e-6, block_bytes=4096)

    # --- Test 3: small ragged spatial (HW=100 < 128) -> lane-dense colwise path
    C3 = 8
    x3 = jax.random.normal(k2, (2, C3, 10, 10), dtype=jnp.float32)
    pa3 = jnp.linspace(0.5, 2.0, C3, dtype=jnp.float32)
    pb3 = jnp.linspace(1.0, 3.0, C3, dtype=jnp.float32)
    na3 = jnp.linspace(-0.5, 0.5, C3, dtype=jnp.float32)
    nb3 = jnp.linspace(0.5, 4.0, C3, dtype=jnp.float32)     # <1 exercises the clamp
    _check(x3, pa3, pb3, na3, nb3, atol=1e-6, rtol=1e-6, block_bytes=4096)

    # --- Test 4: bf16 input -> native 16-bit path (slopes quantized to bf16) -
    x4 = jax.random.normal(k3, (N, C, H, W), dtype=jnp.bfloat16)
    _check(x4, pos_alpha, pos_beta, neg_alpha, neg_beta, atol=2e-2, rtol=2e-2)

    print("KERNEL_OK")
</pallas_src>

<mosaic_0001>
module attributes {stable_mosaic.version = 11 : i64} {
  func.func @_fraclu_rowwise_kernel(%arg0: i32, %arg1: i32, %arg2: memref<8x2xf32, #tpu.memory_space<vmem>>, %arg3: memref<8x256xf32, #tpu.memory_space<vmem>>, %arg4: memref<8x256xf32, #tpu.memory_space<vmem>>) attributes {dimension_semantics = [#tpu.dimension_semantics<parallel>, #tpu.dimension_semantics<parallel>], iteration_bounds = array<i64: 1, 1>, scalar_prefetch = 0 : i64, scratch_operands = 0 : i64, tpu.core_type = #tpu.core_type<tc>, window_params = [{transform_indices = @transform_0, window_bounds = array<i64: 8, 2>}, {transform_indices = @transform_1, window_bounds = array<i64: 8, 256>}, {transform_indices = @transform_2, window_bounds = array<i64: 8, 256>}]} {
    %c0 = arith.constant 0 : index
    %c0_0 = arith.constant 0 : index
    %0 = vector.load %arg3[%c0, %c0_0] : memref<8x256xf32, #tpu.memory_space<vmem>>, vector<8x256xf32>
    %c0_1 = arith.constant 0 : index
    %c0_2 = arith.constant 0 : index
    %1 = vector.load %arg2[%c0_1, %c0_2] : memref<8x2xf32, #tpu.memory_space<vmem>>, vector<8x1xf32>
    %c0_3 = arith.constant 0 : index
    %c1 = arith.constant 1 : index
    %2 = vector.load %arg2[%c0_3, %c1] : memref<8x2xf32, #tpu.memory_space<vmem>>, vector<8x1xf32>
    %cst = arith.constant 0.000000e+00 : f32
    %3 = vector.broadcast %cst : f32 to vector<8x256xf32>
    %4 = arith.cmpf oge, %0, %3 : vector<8x256xf32>
    %5 = vector.shape_cast %1 : vector<8x1xf32> to vector<8x1xf32>
    %6 = vector.broadcast %5 : vector<8x1xf32> to vector<8x256xf32>
    %7 = vector.shape_cast %2 : vector<8x1xf32> to vector<8x1xf32>
    %8 = vector.broadcast %7 : vector<8x1xf32> to vector<8x256xf32>
    %9 = arith.select %4, %6, %8 : vector<8x256xi1>, vector<8x256xf32>
    %10 = arith.mulf %0, %9 : vector<8x256xf32>
    %c0_4 = arith.constant 0 : index
    %c0_5 = arith.constant 0 : index
    %11 = vector.load %arg4[%c0_4, %c0_5] : memref<8x256xf32, #tpu.memory_space<vmem>>, vector<8x256xf32>
    tpu.vector_store %arg4[%c0_4, %c0_5], %10 {strides = array<i32>} : memref<8x256xf32, #tpu.memory_space<vmem>>, vector<8x256xf32>,
    return
  }
  func.func @transform_0(%arg0: i32, %arg1: i32) -> (i32, i32) {
    %c0_i32 = arith.constant 0 : i32
    %c0_i32_0 = arith.constant 0 : i32
    return %arg0, %c0_i32 : i32, i32
  }
  func.func @transform_1(%arg0: i32, %arg1: i32) -> (i32, i32) {
    %c0_i32 = arith.constant 0 : i32
    return %arg0, %arg1 : i32, i32
  }
  func.func @transform_2(%arg0: i32, %arg1: i32) -> (i32, i32) {
    %c0_i32 = arith.constant 0 : i32
    return %arg0, %arg1 : i32, i32
  }
}

</mosaic_0001>

<llo_original>
// kernel: fraclu_forward.1
$region0: #{fraclu_forward.1}
  #allocation0 [shape = 'u32[]', space=smem, size = 0x4, offset = 0x4, fixed_abs, tag = 'smem constant byte address 0x4 - core index']
  #allocation1 [shape = 'u32[144,128]{1,0:T(1,128)}', space=vmem, size = 0x12000, scoped, tag = 'internal scratch']
  %s0 = inlined_call_operand.vmem [shape: f32[8,2], index: 0, kind: input, shape index: {}]
  %s1 = inlined_call_operand.vmem [shape: f32[8,256], index: 1, kind: input, shape index: {}]
  %s2 = inlined_call_operand.vmem [shape: f32[8,256], index: 2, kind: output, shape index: {}]
  %s3 = sld [smem:[#allocation0]]
  $region18: #{fraclu_forward.1} parent=0
    _
  %s5 = ssub.s32 1, %s3
  %s6 = scalar_select 0, %s5, %s3
  // Predicated region
  $region2: #{fraclu_forward.1} parent=0 // pred_check
    _
  $region3: #{fraclu_forward.1} parent=0 // pred_check_branch
    %8 = sbr.rel (0) target = $region5
  $region4: #{fraclu_forward.1} parent=0 // pred_region
    _
  $region5: #{fraclu_forward.1} parent=0 // pred_fallthru
    _
  // Predicated region
  $region6: #{fraclu_forward.1} parent=0 // pred_check
    _
  $region7: #{fraclu_forward.1} parent=0 // pred_check_branch
    %10 = sbr.rel (0) target = $region9
  $region8: #{fraclu_forward.1} parent=0 // pred_region
    _
  $region9: #{fraclu_forward.1} parent=0 // pred_fallthru
    _
  %v11 = vld [vmem:[%s1] sm:$0xff]
  %v12 = vld [vmem:[%s1 + $0x8] sm:$0xff]
  %v13 = vld [vmem:[%s0] sm:$0xff]
  %vm14 = vcmp.ge.f32.partialorder %v11, 0.0
  %vm15 = vcmp.ge.f32.partialorder %v12, 0.0
  %17 = vset.pattern.permute.xlu0 0
  %18 = vperm.xlu0 %17, %v13
  %v19 = vpop.permute.xlu0 %18
  %21 = vset.pattern.permute.xlu0 1
  %22 = vperm.xlu0 %21, %v13
  %v23 = vpop.permute.xlu0 %22
  %v25 = vsel %vm14, %v19, %v23
  %v26 = vsel %vm15, %v19, %v23
  %v27 = vmul.f32 %v11, %v25
  %v28 = vmul.f32 %v12, %v26
  %29 = vst [vmem:[%s2] sm:$0xff] %v27
  %30 = vst [vmem:[%s2 + $0x8] sm:$0xff] %v28
  // Predicated region
  $region10: #{fraclu_forward.1} parent=0 // pred_check
    _
  $region11: #{fraclu_forward.1} parent=0 // pred_check_branch
    %32 = sbr.rel (0) target = $region13
  $region12: #{fraclu_forward.1} parent=0 // pred_region
    _
  $region13: #{fraclu_forward.1} parent=0 // pred_fallthru
    _
  // Predicated region
  $region14: #{fraclu_forward.1} parent=0 // pred_check
    _
  $region15: #{fraclu_forward.1} parent=0 // pred_check_branch
    %34 = sbr.rel (0) target = $region17
  $region16: #{fraclu_forward.1} parent=0 // pred_region
    _
  $region17: #{fraclu_forward.1} parent=0 // pred_fallthru
    _

</llo_original>
